<compile_context>
chip_gen: v7x
topology: tpu7x:2x2x1
jax: 0.10.0
libtpu: 0.0.40
codegen_flags: <defaults>
</compile_context>

<pallas_src>
import functools
import math

import jax
import jax.numpy as jnp
import numpy as np
from jax import lax
from jax.experimental import pallas as pl
from jax.experimental.pallas import tpu as pltpu
from jax.scipy.special import logsumexp


def _round_up(x, m):
    return ((x + m - 1) // m) * m


# ---------------------------------------------------------------------------
# Kernel 1: batch-invariant weight preparation (one grid step per block-column
# of W^T).  Inputs: W^T (twice: full column block + its diagonal slab via a
# second BlockSpec over the same array — no wrapper gather), diag_weight row.
# Outputs: scaled weight in (K, N) layout and the log-diagonal blocks.
# ---------------------------------------------------------------------------
def _weight_prep_kernel(wt_ref, wd_ref, dw_ref, ws_ref, wpl_ref, *, inpd):
    i = pl.program_id(0)                              # block index along `dim`
    wt = wt_ref[...]                                  # (in_f, outpd) column block of W^T
    row = lax.broadcasted_iota(jnp.int32, wt.shape, 0)
    lo = i * inpd
    # strictly-lower rows keep W, the diagonal band gets exp(W), the rest is 0
    w = jnp.where(row < lo, wt,
                  jnp.where(row < lo + inpd, jnp.exp(wt), 0.0))
    nsq = jnp.sum(w * w, axis=0, keepdims=True)       # (1, outpd) row-wise ||w||^2
    scale = jnp.exp(dw_ref[...]) * lax.rsqrt(nsq)     # (1, outpd), EUP exp + rsqrt
    ws_ref[...] = w * scale                           # scaled weight, (K, N) layout
    # log diagonal block, in the (inpd, outpd) layout PyTorch's get_weights returns
    wpl_ref[0] = dw_ref[...] + wd_ref[...] - 0.5 * jnp.log(nsq)


# ---------------------------------------------------------------------------
# Kernel 2: the batch-proportional hot path — one MXU matmul + bias per tile.
# ---------------------------------------------------------------------------
def _matmul_bias_kernel(x_ref, w_ref, b_ref, y_ref, *, use_bf16):
    x = x_ref[...]                                    # (bt, in_f)
    w = w_ref[...]                                    # (in_f, tn)  (K, N)
    if use_bf16:
        x = x.astype(jnp.bfloat16)
        w = w.astype(jnp.bfloat16)
    y_ref[...] = (jnp.dot(x, w, preferred_element_type=jnp.float32)
                  + b_ref[...])


# ---------------------------------------------------------------------------
# Tile selection helpers
# ---------------------------------------------------------------------------
def _pick_tn(out_f):
    """Lane-dense output tile: multiple of 128 dividing out_f, else full width."""
    if out_f % 128 != 0:
        return out_f
    for tn in (512, 384, 256, 128):
        if out_f % tn == 0:
            return tn
    return 128


def _pick_bt(batch, in_f, tn, budget_bytes=12 * 2**20):
    """Batch tile: largest tile with small relative padding that fits VMEM."""
    cands = []
    for bt in (512, 256, 128, 64, 32, 16, 8):
        need = 8 * (bt * in_f + in_f * tn + bt * tn + tn)   # double-buffered f32
        if need > budget_bytes and bt != 8:
            continue
        b_pad = _round_up(max(batch, 1), bt)
        cands.append((bt, b_pad - batch, b_pad))
    for bt, waste, b_pad in cands:        # descending bt: accept small rel. padding
        if waste * 8 <= b_pad:
            return bt
    return min(cands, key=lambda c: (c[1], -c[0]))[0]


# ---------------------------------------------------------------------------
# Forward wrapper: weight prep (once) + batch matmul
# ---------------------------------------------------------------------------
def masked_weight_pallas(x, weight, diag_weight, bias, dim, *, use_bf16=False):
    B, in_f = x.shape
    out_f = weight.shape[0]
    assert weight.shape[1] == in_f
    assert in_f % dim == 0 and out_f % dim == 0
    inpd, outpd = in_f // dim, out_f // dim
    if dim > 1:
        # TODO(synk): add an unaligned fallback (separate diag/off-diag streams).
        assert inpd % 8 == 0 and outpd % 128 == 0, (
            "dim>1 requires in_features/dim % 8 == 0 and out_features/dim % 128 == 0")

    w_t = weight.T                                  # (in_f, out_f), one-time, weight-sized
    dw_row = diag_weight.reshape(1, out_f)
    bias_row = jnp.reshape(bias, (1, out_f)).astype(jnp.float32)

    # ---- 1) weight prep: once per forward call, batch independent ----
    ws_t, wpl = pl.pallas_call(
        functools.partial(_weight_prep_kernel, inpd=inpd),
        out_shape=(jax.ShapeDtypeStruct((in_f, out_f), jnp.float32),
                   jax.ShapeDtypeStruct((dim, inpd, outpd), jnp.float32)),
        grid=(dim,),
        in_specs=[
            pl.BlockSpec((in_f, outpd), lambda i: (0, i)),   # full column block of W^T
            pl.BlockSpec((inpd, outpd), lambda i: (i, i)),   # its diagonal slab (same array)
            pl.BlockSpec((1, outpd), lambda i: (0, i)),      # diag_weight row
        ],
        out_specs=(
            pl.BlockSpec((in_f, outpd), lambda i: (0, i)),   # scaled weight (K, N)
            pl.BlockSpec((1, inpd, outpd), lambda i: (i, 0, 0)),
        ),
        compiler_params=pltpu.CompilerParams(
            dimension_semantics=("parallel",)),
    )(w_t, w_t, dw_row)

    # ---- 2) batch-proportional matmul: y = x @ ws_t + bias ----
    tn = _pick_tn(out_f)
    bt = _pick_bt(B, in_f, tn)
    B_pad = _round_up(max(B, 1), bt)
    nb, nj = B_pad // bt, out_f // tn
    x_pad = jnp.pad(x, ((0, B_pad - B), (0, 0))) if B_pad != B else x

    cp_kwargs = dict(dimension_semantics=("parallel", "parallel"))
    vmem_est = 8 * (bt * in_f + in_f * tn + bt * tn + tn)
    if vmem_est > 12 * 2**20:                        # only override when needed (v7x: 64 MiB)
        cp_kwargs["vmem_limit_bytes"] = int(min(vmem_est * 2, 60 * 2**20))

    y = pl.pallas_call(
        functools.partial(_matmul_bias_kernel, use_bf16=use_bf16),
        out_shape=jax.ShapeDtypeStruct((B_pad, out_f), jnp.float32),
        grid=(nb, nj),
        in_specs=[
            pl.BlockSpec((bt, in_f), lambda b, j: (b, 0)),   # x tile (fetched once per b)
            pl.BlockSpec((in_f, tn), lambda b, j: (0, j)),   # (K, N) weight tile
            pl.BlockSpec((1, tn), lambda b, j: (0, j)),      # bias
        ],
        out_specs=pl.BlockSpec((bt, tn), lambda b, j: (b, j)),
        compiler_params=pltpu.CompilerParams(**cp_kwargs),
    )(x_pad, ws_t, bias_row)

    return y[:B], wpl


# ---------------------------------------------------------------------------
# Module-equivalent wrapper (parameter construction + forward)
# ---------------------------------------------------------------------------
class MaskedWeightJAX:
    def __init__(self, in_features, out_features, dim, key, bias=True):
        assert in_features % dim == 0 and out_features % dim == 0
        self.in_features, self.out_features, self.dim = in_features, out_features, dim
        inpd = in_features // dim
        outpd = out_features // dim

        k_w, k_d, k_b = jax.random.split(key, 3)

        # _weight: zeros, with xavier-uniform block rows filled per dim
        weight = np.zeros((out_features, in_features), dtype=np.float32)
        kws = jax.random.split(k_w, dim)
        for i in range(dim):
            fan_in = (i + 1) * inpd
            bound = math.sqrt(6.0 / (fan_in + outpd))
            block = jax.random.uniform(kws[i], (outpd, fan_in),
                                       minval=-bound, maxval=bound,
                                       dtype=jnp.float32)
            weight[i * outpd:(i + 1) * outpd, 0:fan_in] = np.asarray(block)
        self._weight = jnp.asarray(weight)

        # _diag_weight = log(U(~0,1))
        self._diag_weight = jnp.log(
            jax.random.uniform(k_d, (out_features, 1), minval=1e-4, maxval=1.0,
                               dtype=jnp.float32))

        # bias = U(-1/sqrt(out), 1/sqrt(out))  (or 0 if bias=False)
        if bias:
            b_bound = 1.0 / math.sqrt(out_features)
            self.bias = jax.random.uniform(k_b, (out_features,),
                                           minval=-b_bound, maxval=b_bound,
                                           dtype=jnp.float32)
        else:
            self.bias = jnp.zeros((out_features,), dtype=jnp.float32)

    def forward(self, inputs, grad=None):
        y, wpl = masked_weight_pallas(inputs, self._weight, self._diag_weight,
                                      self.bias, self.dim)
        # PyTorch: g = wpl.transpose(-2,-1).unsqueeze(0).repeat(B,1,1,1)
        B = inputs.shape[0]
        g = jnp.broadcast_to(
            jnp.swapaxes(wpl, -2, -1)[None],
            (B, self.dim, self.out_features // self.dim,
             self.in_features // self.dim))
        if grad is not None:
            g = logsumexp(
                g[..., None, :] + jnp.swapaxes(grad, -2, -1)[..., None, :, :],
                axis=-1)
        return y, g


# ---------------------------------------------------------------------------
# Pure-JAX reference of the PyTorch forward (for a correctness check)
# ---------------------------------------------------------------------------
def _reference_forward(module, x):
    W, dw, b = module._weight, module._diag_weight, module.bias
    dim, in_f, out_f = module.dim, module.in_features, module.out_features
    inpd, outpd = in_f // dim, out_f // dim
    mask_d = np.zeros((out_f, in_f), np.float32)
    mask_o = np.ones((out_f, in_f), np.float32)
    for i in range(dim):
        mask_d[i * outpd:(i + 1) * outpd, i * inpd:(i + 1) * inpd] = 1.0
        mask_o[i * outpd:(i + 1) * outpd, i * inpd:] = 0.0
    mask_d, mask_o = jnp.asarray(mask_d), jnp.asarray(mask_o)

    w = jnp.exp(W) * mask_d + W * mask_o
    nsq = jnp.sum(w * w, axis=-1, keepdims=True)
    w_n = jnp.exp(dw) * w / jnp.sqrt(nsq)
    wpl = dw + W - 0.5 * jnp.log(nsq)
    y = jnp.dot(x, w_n.T, precision=jax.lax.Precision.HIGHEST) + b
    wpl_diag = wpl.reshape(dim, outpd, dim, inpd)[
        jnp.arange(dim), :, jnp.arange(dim), :]
    g = jnp.broadcast_to(wpl_diag[None], (x.shape[0],) + wpl_diag.shape)
    return y, g


def _check_config(batch, in_features, out_features, dim, key):
    k_param, k_x = jax.random.split(key)
    module = MaskedWeightJAX(in_features, out_features, dim, k_param, bias=True)
    x = jax.random.normal(k_x, (batch, in_features), dtype=jnp.float32)

    y, g = module.forward(x)                      # grad=None path
    jax.block_until_ready(y)
    jax.block_until_ready(g)

    assert y.shape == (batch, out_features)
    assert g.shape == (batch, dim, out_features // dim, in_features // dim)
    assert bool(jnp.all(jnp.isfinite(y))) and bool(jnp.all(jnp.isfinite(g)))

    y_ref, g_ref = _reference_forward(module, x)
    # g has no matmul in it -> tight tolerance; y tolerance allows for MXU
    # f32 multi-pass vs XLA HIGHEST-precision accumulation-order differences.
    np.testing.assert_allclose(np.asarray(g), np.asarray(g_ref),
                               rtol=1e-4, atol=1e-4)
    np.testing.assert_allclose(np.asarray(y), np.asarray(y_ref),
                               rtol=1e-2, atol=1e-2)

    # optional grad-combination path (plain-JAX glue): shape smoke test
    d_prev = 2
    grad = jax.random.normal(jax.random.fold_in(key, 7),
                             (batch, dim, in_features // dim, d_prev),
                             dtype=jnp.float32)
    _, g2 = module.forward(x, grad)
    jax.block_until_ready(g2)
    assert g2.shape == (batch, dim, out_features // dim, d_prev)
    assert bool(jnp.all(jnp.isfinite(g2)))


if __name__ == "__main__":
    key = jax.random.PRNGKey(0)
    k1, k2 = jax.random.split(key)

    # main config: dim>1 block-triangular structure, 128-aligned blocks
    _check_config(batch=16, in_features=512, out_features=512, dim=4, key=k1)
    # secondary config: dim=1, non-128 widths, batch padding path
    _check_config(batch=5, in_features=192, out_features=320, dim=1, key=k2)

    print("KERNEL_OK")
</pallas_src>

<mosaic_0001>
module attributes {stable_mosaic.version = 11 : i64} {
  func.func @_weight_prep_kernel(%arg0: i32, %arg1: memref<512x128xf32, #tpu.memory_space<vmem>>, %arg2: memref<128x128xf32, #tpu.memory_space<vmem>>, %arg3: memref<1x128xf32, #tpu.memory_space<vmem>>, %arg4: memref<512x128xf32, #tpu.memory_space<vmem>>, %arg5: memref<1x128x128xf32, #tpu.memory_space<vmem>>) attributes {dimension_semantics = [#tpu.dimension_semantics<parallel>], iteration_bounds = array<i64: 4>, scalar_prefetch = 0 : i64, scratch_operands = 0 : i64, tpu.core_type = #tpu.core_type<tc>, window_params = [{transform_indices = @transform_0, window_bounds = array<i64: 512, 128>}, {transform_indices = @transform_1, window_bounds = array<i64: 128, 128>}, {transform_indices = @transform_2, window_bounds = array<i64: 1, 128>}, {transform_indices = @transform_3, window_bounds = array<i64: 512, 128>}, {transform_indices = @transform_4, window_bounds = array<i64: 1, 128, 128>}]} {
    %c0 = arith.constant 0 : index
    %c0_0 = arith.constant 0 : index
    %0 = vector.load %arg1[%c0, %c0_0] : memref<512x128xf32, #tpu.memory_space<vmem>>, vector<512x128xf32>
    %1 = tpu.iota {dimensions = array<i32: 0>} : vector<512x128xi32>
    %c128_i32 = arith.constant 128 : i32
    %2 = arith.muli %arg0, %c128_i32 : i32
    %3 = vector.broadcast %2 : i32 to vector<512x128xi32>
    %4 = arith.cmpi slt, %1, %3 : vector<512x128xi32>
    %c128_i32_1 = arith.constant 128 : i32
    %5 = arith.addi %2, %c128_i32_1 : i32
    %6 = vector.broadcast %5 : i32 to vector<512x128xi32>
    %7 = arith.cmpi slt, %1, %6 : vector<512x128xi32>
    %8 = math.exp %0 : vector<512x128xf32>
    %cst = arith.constant 0.000000e+00 : f32
    %9 = vector.broadcast %cst : f32 to vector<512x128xf32>
    %10 = arith.select %7, %8, %9 : vector<512x128xi1>, vector<512x128xf32>
    %11 = arith.select %4, %0, %10 : vector<512x128xi1>, vector<512x128xf32>
    %12 = arith.mulf %11, %11 : vector<512x128xf32>
    %cst_2 = arith.constant dense<0.000000e+00> : vector<128xf32>
    %13 = vector.multi_reduction <add>, %12, %cst_2 [0] : vector<512x128xf32> to vector<128xf32>
    %14 = vector.shape_cast %13 : vector<128xf32> to vector<1x128xf32>
    %c0_3 = arith.constant 0 : index
    %c0_4 = arith.constant 0 : index
    %15 = vector.load %arg3[%c0_3, %c0_4] : memref<1x128xf32, #tpu.memory_space<vmem>>, vector<1x128xf32>
    %16 = math.exp %15 : vector<1x128xf32>
    %17 = math.rsqrt %14 : vector<1x128xf32>
    %18 = arith.mulf %16, %17 : vector<1x128xf32>
    %19 = vector.broadcast %18 : vector<1x128xf32> to vector<512x128xf32>
    %20 = arith.mulf %11, %19 : vector<512x128xf32>
    %c0_5 = arith.constant 0 : index
    %c0_6 = arith.constant 0 : index
    %21 = vector.load %arg4[%c0_5, %c0_6] : memref<512x128xf32, #tpu.memory_space<vmem>>, vector<512x128xf32>
    tpu.vector_store %arg4[%c0_5, %c0_6], %20 {strides = array<i32>} : memref<512x128xf32, #tpu.memory_space<vmem>>, vector<512x128xf32>,
    %c0_7 = arith.constant 0 : index
    %c0_8 = arith.constant 0 : index
    %22 = vector.load %arg3[%c0_7, %c0_8] : memref<1x128xf32, #tpu.memory_space<vmem>>, vector<1x128xf32>
    %c0_9 = arith.constant 0 : index
    %c0_10 = arith.constant 0 : index
    %23 = vector.load %arg2[%c0_9, %c0_10] : memref<128x128xf32, #tpu.memory_space<vmem>>, vector<128x128xf32>
    %24 = vector.broadcast %22 : vector<1x128xf32> to vector<128x128xf32>
    %25 = arith.addf %24, %23 : vector<128x128xf32>
    %26 = math.log %14 : vector<1x128xf32>
    %cst_11 = arith.constant 5.000000e-01 : f32
    %27 = vector.broadcast %cst_11 : f32 to vector<1x128xf32>
    %28 = arith.mulf %27, %26 : vector<1x128xf32>
    %29 = vector.broadcast %28 : vector<1x128xf32> to vector<128x128xf32>
    %30 = arith.subf %25, %29 : vector<128x128xf32>
    %c0_12 = arith.constant 0 : index
    %c0_13 = arith.constant 0 : index
    %c0_14 = arith.constant 0 : index
    %31 = vector.load %arg5[%c0_12, %c0_13, %c0_14] : memref<1x128x128xf32, #tpu.memory_space<vmem>>, vector<1x128x128xf32>
    %32 = vector.shape_cast %31 : vector<1x128x128xf32> to vector<128x128xf32>
    %33 = vector.shape_cast %30 : vector<128x128xf32> to vector<1x128x128xf32>
    tpu.vector_store %arg5[%c0_12, %c0_13, %c0_14], %33 {strides = array<i32>} : memref<1x128x128xf32, #tpu.memory_space<vmem>>, vector<1x128x128xf32>,
    return
  }
  func.func @transform_0(%arg0: i32) -> (i32, i32) {
    %c0_i32 = arith.constant 0 : i32
    %c0_i32_0 = arith.constant 0 : i32
    return %c0_i32, %arg0 : i32, i32
  }
  func.func @transform_1(%arg0: i32) -> (i32, i32) {
    %c0_i32 = arith.constant 0 : i32
    return %arg0, %arg0 : i32, i32
  }
  func.func @transform_2(%arg0: i32) -> (i32, i32) {
    %c0_i32 = arith.constant 0 : i32
    %c0_i32_0 = arith.constant 0 : i32
    return %c0_i32, %arg0 : i32, i32
  }
  func.func @transform_3(%arg0: i32) -> (i32, i32) {
    %c0_i32 = arith.constant 0 : i32
    %c0_i32_0 = arith.constant 0 : i32
    return %c0_i32, %arg0 : i32, i32
  }
  func.func @transform_4(%arg0: i32) -> (i32, i32, i32) {
    %c0_i32 = arith.constant 0 : i32
    %c0_i32_0 = arith.constant 0 : i32
    %c0_i32_1 = arith.constant 0 : i32
    return %arg0, %c0_i32, %c0_i32_0 : i32, i32, i32
  }
}

</mosaic_0001>

<llo_original>
// kernel: tpu_custom_call.1
$region0: #{tpu_custom_call.1}
  #allocation0 [shape = 'u32[]', space=smem, size = 0x4, offset = 0x4, fixed_abs, tag = 'smem constant byte address 0x4 - core index']
  #allocation1 [shape = 'u32[144,128]{1,0:T(1,128)}', space=vmem, size = 0x12000, scoped, tag = 'internal scratch']
  %s0 = inlined_call_operand.hbm [shape: f32[512,512], index: 0, kind: input, shape index: {}]
  %s1 = inlined_call_operand.hbm [shape: f32[512,512], index: 1, kind: input, shape index: {}]
  %s2 = inlined_call_operand.vmem [shape: f32[1,512], index: 2, kind: input, shape index: {}]
  %s3 = inlined_call_operand.hbm [shape: f32[512,512], index: 3, kind: output, shape index: {0}]
  %s4 = inlined_call_operand.hbm [shape: f32[4,128,128], index: 4, kind: output, shape index: {1}]
  %5 = xla_tuple %s3, %s4
  %s6 = sld [smem:[#allocation0]]
  $region61: #{tpu_custom_call.1} parent=0
    _
  %s8 = ssub.s32 1, %s6
  %s9 = scalar_select 0, %s8, %s6
  $region1: #{tpu_custom_call.1} parent=0
    #allocation2 [shape = 'u8[524288]{0}', space=vmem, size = 0x80000, scoped, tag = 'input window, operand 0']
    #allocation3 [shape = 's32[2]{0}', space=sflag, size = 0x8, scoped, tag = 'scoped memory for tpu_custom_call.1']
    #allocation4 [shape = 's32[2]{0}', space=sflag, size = 0x8, scoped, tag = 'scoped memory for tpu_custom_call.1']
    #allocation5 [shape = 'u8[131072]{0}', space=vmem, size = 0x20000, scoped, tag = 'input window, operand 1']
    #allocation6 [shape = 's32[2]{0}', space=sflag, size = 0x8, scoped, tag = 'scoped memory for tpu_custom_call.1']
    #allocation7 [shape = 'u8[524288]{0}', space=vmem, size = 0x80000, scoped, tag = 'output window, operand 0']
    #allocation8 [shape = 'u8[131072]{0}', space=vmem, size = 0x20000, scoped, tag = 'output window, operand 1']
    #allocation9 [shape = 's32[2]{0}', space=sflag, size = 0x8, scoped, tag = 'scoped memory for tpu_custom_call.1']
    %10 = vsyncpa [#allocation3], 0
    %s11 = scalar_lea.sflag [#allocation3], 1
    %12 = vsyncpa %s11, 0
    %13 = vsyncpa [#allocation6], 0
    %s14 = scalar_lea.sflag [#allocation6], 1
    %15 = vsyncpa %s14, 0
    %16 = vsyncpa [#allocation4], 0
    %s17 = scalar_lea.sflag [#allocation4], 1
    %18 = vsyncpa %s17, 0
    %19 = vsyncpa [#allocation9], 0
    %s20 = scalar_lea.sflag [#allocation9], 1
    %21 = vsyncpa %s20, 0
    loop: start=0, step=1, limit=6
    $region2: #{tpu_custom_call.1} parent=1 // loop_pre_header
      _
    $region3: #{tpu_custom_call.1} parent=1 // loop_header
      %s23 = sphi 0, %s27
      %p24 = scmp.ge.s32.totalorder %s23, 6
      %s33 = sphi 0, %s35
      %s36 = sphi 0, %s33
      %s37 = sphi 0, %s36
      %s53 = sphi 0, %s37
      %s61 = sphi 0, %s63
      %s64 = sphi 0, %s61
      %s65 = sphi 0, %s64
      %s81 = sphi 0, %s65
      %s87 = sphi 0, %s89
      %s90 = sphi 0, %s87
      %s91 = sphi 0, %s90
      %s107 = sphi 0, %s91
      %s113 = sphi 0, %s115
      %s116 = sphi 0, %s113
      %s117 = sphi 0, %s116
      %s133 = sphi 0, %s117
      %s139 = sphi 0, %s141
      %s142 = sphi 0, %s139
      %s143 = sphi 0, %s142
      %s159 = sphi 0, %s143
    $region4: #{tpu_custom_call.1} parent=1 // loop_header_branch
      %26 = sbr.rel (%p24) target = $region8
    $region5: #{tpu_custom_call.1} parent=1 // loop_body
      %s28 = ssub.s32 %s23, 1
      %s29 = ssub.s32 %s23, 2
      %s30 = sadd.s32 %s23, 1
      %s31 = ssub.s32 %s23, %s30
      %p32 = scmp.eq.s32.totalorder %s31, 0
      %s34 = sadd.s32 %s33, 1
      %s35 = scalar_select %p32, %s33, %s34
      %p38 = pneg %p32
      %p39 = scmp.eq.s32.totalorder %s23, 3
      %p40 = por %p38, %p39
      %p41 = scmp.ne.s32.totalorder %s33, %s36
      %p42 = scmp.eq.s32.totalorder %s23, 0
      %p43 = por %p41, %p42
      %p44 = scmp.ne.s32.totalorder %s33, %s36
      %p45 = scmp.eq.s32.totalorder %s28, 3
      %p46 = por %p44, %p45
      %p47 = scmp.ne.s32.totalorder %s36, %s37
      %p48 = scmp.eq.s32.totalorder %s28, 0
      %p49 = por %p47, %p48
      %p50 = scmp.ne.s32.totalorder %s36, %s37
      %p51 = scmp.eq.s32.totalorder %s29, 3
      %p52 = por %p50, %p51
      %p54 = scmp.ne.s32.totalorder %s37, %s53
      %p55 = scmp.eq.s32.totalorder %s29, 0
      %p56 = por %p54, %p55
      %s57 = ssub.s32 %s23, %s30
      %s58 = ssub.s32 %s23, %s30
      %s59 = sor.u32 %s57, %s58
      %p60 = scmp.eq.s32.totalorder %s59, 0
      %s62 = sadd.s32 %s61, 1
      %s63 = scalar_select %p60, %s61, %s62
      %p66 = pneg %p60
      %p67 = scmp.eq.s32.totalorder %s23, 3
      %p68 = por %p66, %p67
      %p69 = scmp.ne.s32.totalorder %s61, %s64
      %p70 = scmp.eq.s32.totalorder %s23, 0
      %p71 = por %p69, %p70
      %p72 = scmp.ne.s32.totalorder %s61, %s64
      %p73 = scmp.eq.s32.totalorder %s28, 3
      %p74 = por %p72, %p73
      %p75 = scmp.ne.s32.totalorder %s64, %s65
      %p76 = scmp.eq.s32.totalorder %s28, 0
      %p77 = por %p75, %p76
      %p78 = scmp.ne.s32.totalorder %s64, %s65
      %p79 = scmp.eq.s32.totalorder %s29, 3
      %p80 = por %p78, %p79
      %p82 = scmp.ne.s32.totalorder %s65, %s81
      %p83 = scmp.eq.s32.totalorder %s29, 0
      %p84 = por %p82, %p83
      %s85 = ssub.s32 %s23, %s30
      %p86 = scmp.eq.s32.totalorder %s85, 0
      %s88 = sadd.s32 %s87, 1
      %s89 = scalar_select %p86, %s87, %s88
      %p92 = pneg %p86
      %p93 = scmp.eq.s32.totalorder %s23, 3
      %p94 = por %p92, %p93
      %p95 = scmp.ne.s32.totalorder %s87, %s90
      %p96 = scmp.eq.s32.totalorder %s23, 0
      %p97 = por %p95, %p96
      %p98 = scmp.ne.s32.totalorder %s87, %s90
      %p99 = scmp.eq.s32.totalorder %s28, 3
      %p100 = por %p98, %p99
      %p101 = scmp.ne.s32.totalorder %s90, %s91
      %p102 = scmp.eq.s32.totalorder %s28, 0
      %p103 = por %p101, %p102
      %p104 = scmp.ne.s32.totalorder %s90, %s91
      %p105 = scmp.eq.s32.totalorder %s29, 3
      %p106 = por %p104, %p105
      %p108 = scmp.ne.s32.totalorder %s91, %s107
      %p109 = scmp.eq.s32.totalorder %s29, 0
      %p110 = por %p108, %p109
      %s111 = ssub.s32 %s23, %s30
      %p112 = scmp.eq.s32.totalorder %s111, 0
      %s114 = sadd.s32 %s113, 1
      %s115 = scalar_select %p112, %s113, %s114
      %p118 = pneg %p112
      %p119 = scmp.eq.s32.totalorder %s23, 3
      %p120 = por %p118, %p119
      %p121 = scmp.ne.s32.totalorder %s113, %s116
      %p122 = scmp.eq.s32.totalorder %s23, 0
      %p123 = por %p121, %p122
      %p124 = scmp.ne.s32.totalorder %s113, %s116
      %p125 = scmp.eq.s32.totalorder %s28, 3
      %p126 = por %p124, %p125
      %p127 = scmp.ne.s32.totalorder %s116, %s117
      %p128 = scmp.eq.s32.totalorder %s28, 0
      %p129 = por %p127, %p128
      %p130 = scmp.ne.s32.totalorder %s116, %s117
      %p131 = scmp.eq.s32.totalorder %s29, 3
      %p132 = por %p130, %p131
      %p134 = scmp.ne.s32.totalorder %s117, %s133
      %p135 = scmp.eq.s32.totalorder %s29, 0
      %p136 = por %p134, %p135
      %s137 = ssub.s32 %s23, %s30
      %p138 = scmp.eq.s32.totalorder %s137, 0
      %s140 = sadd.s32 %s139, 1
      %s141 = scalar_select %p138, %s139, %s140
      %p144 = pneg %p138
      %p145 = scmp.eq.s32.totalorder %s23, 3
      %p146 = por %p144, %p145
      %p147 = scmp.ne.s32.totalorder %s139, %s142
      %p148 = scmp.eq.s32.totalorder %s23, 0
      %p149 = por %p147, %p148
      %p150 = scmp.ne.s32.totalorder %s139, %s142
      %p151 = scmp.eq.s32.totalorder %s28, 3
      %p152 = por %p150, %p151
      %p153 = scmp.ne.s32.totalorder %s142, %s143
      %p154 = scmp.eq.s32.totalorder %s28, 0
      %p155 = por %p153, %p154
      %p156 = scmp.ne.s32.totalorder %s142, %s143
      %p157 = scmp.eq.s32.totalorder %s29, 3
      %p158 = por %p156, %p157
      %p160 = scmp.ne.s32.totalorder %s143, %s159
      %p161 = scmp.eq.s32.totalorder %s29, 0
      %p162 = por %p160, %p161
      %p163 = scmp.le.s32.totalorder 1, %s23
      %p164 = scmp.lt.s32.totalorder %s23, 5
      %p165 = pnand %p163, %p164
      %p166 = pneg %p165
      // Predicated region
      $region9: #{tpu_custom_call.1} parent=5 // pred_check
        _
      $region10: #{tpu_custom_call.1} parent=5 // pred_check_branch
        %168 = sbr.rel (%p165) target = $region12
      $region11: #{tpu_custom_call.1} parent=5 // pred_region
        %s169 = ssub.s32 %s23, 1
      $region12: #{tpu_custom_call.1} parent=5 // pred_fallthru
        _
      %p170 = scmp.lt.s32.totalorder %s23, 4
      // Predicated region
      $region13: #{tpu_custom_call.1} parent=5 // pred_check
        %p171 = pneg %p170
      $region14: #{tpu_custom_call.1} parent=5 // pred_check_branch
        %173 = sbr.rel (%p171) target = $region16
      $region15: #{tpu_custom_call.1} parent=5 // pred_region
        // Predicated region
        $region17: #{tpu_custom_call.1} parent=15 // pred_check
          %p174 = pneg %p43
        $region18: #{tpu_custom_call.1} parent=15 // pred_check_branch
          %176 = sbr.rel (%p174) target = $region20
        $region19: #{tpu_custom_call.1} parent=15 // pred_region
          %s177 = sand.u32 %s33, 1
          %s178 = scalar_lea.sflag [#allocation3], %s177
          %s179 = sand.u32 %s33, 1
          %s180 = smul.addr %s179, 512
          %s181 = scalar_lea.vmem [#allocation2], %s180
          %s183 = ssub.s32 8192, 8192
          %184 = vsyncadd %s178, %s183
          %s185 = smul.addr %s23, 128
          %s186 = scalar_lea.hbm %s0, %s185
          %s187 = sshll.u32 %s181, 4
          %s188 = int_to_ptr.vmem [resolvable:$true] %s187
          %193 = dma.hbm_to_vmem [thread:$0]  %s186, 8192, %s188, %s178, 512, 128, 8
        $region20: #{tpu_custom_call.1} parent=15 // pred_fallthru
          _
        // Predicated region
        $region21: #{tpu_custom_call.1} parent=15 // pred_check
          %p194 = pneg %p71
        $region22: #{tpu_custom_call.1} parent=15 // pred_check_branch
          %196 = sbr.rel (%p194) target = $region24
        $region23: #{tpu_custom_call.1} parent=15 // pred_region
          %s197 = sand.u32 %s61, 1
          %s198 = scalar_lea.sflag [#allocation6], %s197
          %s199 = sand.u32 %s61, 1
          %s200 = smul.addr %s199, 128
          %s201 = scalar_lea.vmem [#allocation5], %s200
          %s202 = smul.u32 16, %s23
          %s204 = ssub.s32 2048, 2048
          %205 = vsyncadd %s198, %s204
          %s206 = smul.addr %s202, 4
          %s207 = sadd.s32 %s23, %s206
          %s208 = smul.addr %s207, 128
          %s209 = scalar_lea.hbm %s1, %s208
          %s210 = sshll.u32 %s201, 4
          %s211 = int_to_ptr.vmem [resolvable:$true] %s210
          %216 = dma.hbm_to_vmem [thread:$0]  %s209, 2048, %s211, %s198, 512, 128, 8
        $region24: #{tpu_custom_call.1} parent=15 // pred_fallthru
          _
        // Predicated region
        $region25: #{tpu_custom_call.1} parent=15 // pred_check
          %p217 = pneg %p97
        $region26: #{tpu_custom_call.1} parent=15 // pred_check_branch
          %219 = sbr.rel (%p217) target = $region28
        $region27: #{tpu_custom_call.1} parent=15 // pred_region
          %p220 = scmp.lt.s32.totalorder %s23, 3
          %s221 = scalar_select %p220, %s23, 3
          %s222 = scalar_lea.vmem %s2, %s221
        $region28: #{tpu_custom_call.1} parent=15 // pred_fallthru
          _
      $region16: #{tpu_custom_call.1} parent=5 // pred_fallthru
        _
      %p223 = scmp.le.s32.totalorder 1, %s23
      %p224 = scmp.lt.s32.totalorder %s23, 5
      %p225 = pnand %p223, %p224
      %p226 = pneg %p225
      // Predicated region
      $region29: #{tpu_custom_call.1} parent=5 // pred_check
        _
      $region30: #{tpu_custom_call.1} parent=5 // pred_check_branch
        %228 = sbr.rel (%p225) target = $region32
      $region31: #{tpu_custom_call.1} parent=5 // pred_region
        %s229 = ssub.s32 %s23, 1
        %s230 = sand.u32 %s36, 1
        %s231 = scalar_lea.sflag [#allocation3], %s230
        %s232 = sand.u32 %s36, 1
        %s233 = smul.addr %s232, 512
        %s234 = scalar_lea.vmem [#allocation2], %s233
        // Predicated region
        $region33: #{tpu_custom_call.1} parent=31 // pred_check
          %p235 = pneg %p49
        $region34: #{tpu_custom_call.1} parent=31 // pred_check_branch
          %237 = sbr.rel (%p235) target = $region36
        $region35: #{tpu_custom_call.1} parent=31 // pred_region
          %238 = dma.done %s231, 8192
        $region36: #{tpu_custom_call.1} parent=31 // pred_fallthru
          _
        %s239 = sand.u32 %s64, 1
        %s240 = scalar_lea.sflag [#allocation6], %s239
        %s241 = sand.u32 %s64, 1
        %s242 = smul.addr %s241, 128
        %s243 = scalar_lea.vmem [#allocation5], %s242
        // Predicated region
        $region37: #{tpu_custom_call.1} parent=31 // pred_check
          %p244 = pneg %p77
        $region38: #{tpu_custom_call.1} parent=31 // pred_check_branch
          %246 = sbr.rel (%p244) target = $region40
        $region39: #{tpu_custom_call.1} parent=31 // pred_region
          %247 = dma.done %s240, 2048
        $region40: #{tpu_custom_call.1} parent=31 // pred_fallthru
          _
        %s248 = sand.u32 %s36, 1
        %s249 = scalar_lea.sflag [#allocation3], %s248
        %s250 = sand.u32 %s36, 1
        %s251 = smul.addr %s250, 512
        %s252 = scalar_lea.vmem [#allocation2], %s251
        %p253 = pneg %p49
        %p254 = pneg %p46
        %s255 = sand.u32 %s64, 1
        %s256 = scalar_lea.sflag [#allocation6], %s255
        %s257 = sand.u32 %s64, 1
        %s258 = smul.addr %s257, 128
        %s259 = scalar_lea.vmem [#allocation5], %s258
        %p260 = pneg %p77
        %p261 = pneg %p74
        %p262 = scmp.lt.s32.totalorder %s28, 3
        %s263 = scalar_select %p262, %s28, 3
        %s264 = scalar_lea.vmem %s2, %s263
        %p265 = pneg %p103
        %p266 = pneg %p100
        %p267 = pneg %p129
        %p268 = pneg %p126
        %s269 = sand.u32 %s116, 1
        %s270 = scalar_lea.sflag [#allocation4], %s269
        %s271 = sand.u32 %s116, 1
        %s272 = smul.addr %s271, 512
        %s273 = scalar_lea.vmem [#allocation7], %s272
        %p274 = pneg %p155
        %p275 = pneg %p152
        %s276 = sand.u32 %s142, 1
        %s277 = scalar_lea.sflag [#allocation9], %s276
        %s278 = sand.u32 %s142, 1
        %s279 = smul.addr %s278, 128
        %s280 = scalar_lea.vmem [#allocation8], %s279
        %s281 = smul.u32 16, %s28
        %p282 = scmp.lt.s32.totalorder %s28, 3
        %s283 = scalar_select %p282, %s28, 3
        %s284 = scalar_lea.vmem %s2, %s283
        %v285 = vld [vmem:[%s234] sm:$0xff]
        %v286 = vld [vmem:[%s234 + $0x8] sm:$0xff]
        %v287 = vld [vmem:[%s234 + $0x10] sm:$0xff]
        %v288 = vld [vmem:[%s234 + $0x18] sm:$0xff]
        %v289 = vld [vmem:[%s234 + $0x20] sm:$0xff]
        %v290 = vld [vmem:[%s234 + $0x28] sm:$0xff]
        %v291 = vld [vmem:[%s234 + $0x30] sm:$0xff]
        %v292 = vld [vmem:[%s234 + $0x38] sm:$0xff]
        %v293 = vld [vmem:[%s234 + $0x40] sm:$0xff]
        %v294 = vld [vmem:[%s234 + $0x48] sm:$0xff]
        %v295 = vld [vmem:[%s234 + $0x50] sm:$0xff]
        %v296 = vld [vmem:[%s234 + $0x58] sm:$0xff]
        %v297 = vld [vmem:[%s234 + $0x60] sm:$0xff]
        %v298 = vld [vmem:[%s234 + $0x68] sm:$0xff]
        %v299 = vld [vmem:[%s234 + $0x70] sm:$0xff]
        %v300 = vld [vmem:[%s234 + $0x78] sm:$0xff]
        %v301 = vld [vmem:[%s234 + $0x80] sm:$0xff]
        %v302 = vld [vmem:[%s234 + $0x88] sm:$0xff]
        %v303 = vld [vmem:[%s234 + $0x90] sm:$0xff]
        %v304 = vld [vmem:[%s234 + $0x98] sm:$0xff]
        %v305 = vld [vmem:[%s234 + $0xa0] sm:$0xff]
        %v306 = vld [vmem:[%s234 + $0xa8] sm:$0xff]
        %v307 = vld [vmem:[%s234 + $0xb0] sm:$0xff]
        %v308 = vld [vmem:[%s234 + $0xb8] sm:$0xff]
        %v309 = vld [vmem:[%s234 + $0xc0] sm:$0xff]
        %v310 = vld [vmem:[%s234 + $0xc8] sm:$0xff]
        %v311 = vld [vmem:[%s234 + $0xd0] sm:$0xff]
        %v312 = vld [vmem:[%s234 + $0xd8] sm:$0xff]
        %v313 = vld [vmem:[%s234 + $0xe0] sm:$0xff]
        %v314 = vld [vmem:[%s234 + $0xe8] sm:$0xff]
        %v315 = vld [vmem:[%s234 + $0xf0] sm:$0xff]
        %v316 = vld [vmem:[%s234 + $0xf8] sm:$0xff]
        %v317 = vld [vmem:[%s234 + $0x100] sm:$0xff]
        %v318 = vld [vmem:[%s234 + $0x108] sm:$0xff]
        %v319 = vld [vmem:[%s234 + $0x110] sm:$0xff]
        %v320 = vld [vmem:[%s234 + $0x118] sm:$0xff]
        %v321 = vld [vmem:[%s234 + $0x120] sm:$0xff]
        %v322 = vld [vmem:[%s234 + $0x128] sm:$0xff]
        %v323 = vld [vmem:[%s234 + $0x130] sm:$0xff]
        %v324 = vld [vmem:[%s234 + $0x138] sm:$0xff]
        %v325 = vld [vmem:[%s234 + $0x140] sm:$0xff]
        %v326 = vld [vmem:[%s234 + $0x148] sm:$0xff]
        %v327 = vld [vmem:[%s234 + $0x150] sm:$0xff]
        %v328 = vld [vmem:[%s234 + $0x158] sm:$0xff]
        %v329 = vld [vmem:[%s234 + $0x160] sm:$0xff]
        %v330 = vld [vmem:[%s234 + $0x168] sm:$0xff]
        %v331 = vld [vmem:[%s234 + $0x170] sm:$0xff]
        %v332 = vld [vmem:[%s234 + $0x178] sm:$0xff]
        %v333 = vld [vmem:[%s234 + $0x180] sm:$0xff]
        %v334 = vld [vmem:[%s234 + $0x188] sm:$0xff]
        %v335 = vld [vmem:[%s234 + $0x190] sm:$0xff]
        %v336 = vld [vmem:[%s234 + $0x198] sm:$0xff]
        %v337 = vld [vmem:[%s234 + $0x1a0] sm:$0xff]
        %v338 = vld [vmem:[%s234 + $0x1a8] sm:$0xff]
        %v339 = vld [vmem:[%s234 + $0x1b0] sm:$0xff]
        %v340 = vld [vmem:[%s234 + $0x1b8] sm:$0xff]
        %v341 = vld [vmem:[%s234 + $0x1c0] sm:$0xff]
        %v342 = vld [vmem:[%s234 + $0x1c8] sm:$0xff]
        %v343 = vld [vmem:[%s234 + $0x1d0] sm:$0xff]
        %v344 = vld [vmem:[%s234 + $0x1d8] sm:$0xff]
        %v345 = vld [vmem:[%s234 + $0x1e0] sm:$0xff]
        %v346 = vld [vmem:[%s234 + $0x1e8] sm:$0xff]
        %v347 = vld [vmem:[%s234 + $0x1f0] sm:$0xff]
        %v348 = vld [vmem:[%s234 + $0x1f8] sm:$0xff]
        %v349 = vlaneseq
        %v350 = vshrl.u32 %v349, 7
        %v351 = vadd.s32 %v350, 8
        %v352 = vadd.s32 %v350, 16
        %v353 = vadd.s32 %v350, 24
        %v354 = vadd.s32 %v350, 32
        %v355 = vadd.s32 %v350, 40
        %v356 = vadd.s32 %v350, 48
        %v357 = vadd.s32 %v350, 56
        %v358 = vadd.s32 %v350, 64
        %v359 = vadd.s32 %v350, 72
        %v360 = vadd.s32 %v350, 80
        %v361 = vadd.s32 %v350, 88
        %v362 = vadd.s32 %v350, 96
        %v363 = vadd.s32 %v350, 104
        %v364 = vadd.s32 %v350, 112
        %v365 = vadd.s32 %v350, 120
        %v366 = vadd.s32 %v350, 128
        %v367 = vadd.s32 %v350, 136
        %v368 = vadd.s32 %v350, 144
        %v369 = vadd.s32 %v350, 152
        %v370 = vadd.s32 %v350, 160
        %v371 = vadd.s32 %v350, 168
        %v372 = vadd.s32 %v350, 176
        %v373 = vadd.s32 %v350, 184
        %v374 = vadd.s32 %v350, 192
        %v375 = vadd.s32 %v350, 200
        %v376 = vadd.s32 %v350, 208
        %v377 = vadd.s32 %v350, 216
        %v378 = vadd.s32 %v350, 224
        %v379 = vadd.s32 %v350, 232
        %v380 = vadd.s32 %v350, 240
        %v381 = vadd.s32 %v350, 248
        %v382 = vadd.s32 %v350, 256
        %v383 = vadd.s32 %v350, 264
        %v384 = vadd.s32 %v350, 272
        %v385 = vadd.s32 %v350, 280
        %v386 = vadd.s32 %v350, 288
        %v387 = vadd.s32 %v350, 296
        %v388 = vadd.s32 %v350, 304
        %v389 = vadd.s32 %v350, 312
        %v390 = vadd.s32 %v350, 320
        %v391 = vadd.s32 %v350, 328
        %v392 = vadd.s32 %v350, 336
        %v393 = vadd.s32 %v350, 344
        %v394 = vadd.s32 %v350, 352
        %v395 = vadd.s32 %v350, 360
        %v396 = vadd.s32 %v350, 368
        %v397 = vadd.s32 %v350, 376
        %v398 = vadd.s32 %v350, 384
        %v399 = vadd.s32 %v350, 392
        %v400 = vadd.s32 %v350, 400
        %v401 = vadd.s32 %v350, 408
        %v402 = vadd.s32 %v350, 416
        %v403 = vadd.s32 %v350, 424
        %v404 = vadd.s32 %v350, 432
        %v405 = vadd.s32 %v350, 440
        %v406 = vadd.s32 %v350, 448
        %v407 = vadd.s32 %v350, 456
        %v408 = vadd.s32 %v350, 464
        %v409 = vadd.s32 %v350, 472
        %v410 = vadd.s32 %v350, 480
        %v411 = vadd.s32 %v350, 488
        %v412 = vadd.s32 %v350, 496
        %v413 = vadd.s32 %v350, 504
        %s414 = smul.u32 %s28, 128
        %v415 = vstv %s414
        %vm416 = vcmp.lt.s32.totalorder %v350, %v415
        %vm417 = vcmp.lt.s32.totalorder %v351, %v415
        %vm418 = vcmp.lt.s32.totalorder %v352, %v415
        %vm419 = vcmp.lt.s32.totalorder %v353, %v415
        %vm420 = vcmp.lt.s32.totalorder %v354, %v415
        %vm421 = vcmp.lt.s32.totalorder %v355, %v415
        %vm422 = vcmp.lt.s32.totalorder %v356, %v415
        %vm423 = vcmp.lt.s32.totalorder %v357, %v415
        %vm424 = vcmp.lt.s32.totalorder %v358, %v415
        %vm425 = vcmp.lt.s32.totalorder %v359, %v415
        %vm426 = vcmp.lt.s32.totalorder %v360, %v415
        %vm427 = vcmp.lt.s32.totalorder %v361, %v415
        %vm428 = vcmp.lt.s32.totalorder %v362, %v415
        %vm429 = vcmp.lt.s32.totalorder %v363, %v415
        %vm430 = vcmp.lt.s32.totalorder %v364, %v415
        %vm431 = vcmp.lt.s32.totalorder %v365, %v415
        %vm432 = vcmp.lt.s32.totalorder %v366, %v415
        %vm433 = vcmp.lt.s32.totalorder %v367, %v415
        %vm434 = vcmp.lt.s32.totalorder %v368, %v415
        %vm435 = vcmp.lt.s32.totalorder %v369, %v415
        %vm436 = vcmp.lt.s32.totalorder %v370, %v415
        %vm437 = vcmp.lt.s32.totalorder %v371, %v415
        %vm438 = vcmp.lt.s32.totalorder %v372, %v415
        %vm439 = vcmp.lt.s32.totalorder %v373, %v415
        %vm440 = vcmp.lt.s32.totalorder %v374, %v415
        %vm441 = vcmp.lt.s32.totalorder %v375, %v415
        %vm442 = vcmp.lt.s32.totalorder %v376, %v415
        %vm443 = vcmp.lt.s32.totalorder %v377, %v415
        %vm444 = vcmp.lt.s32.totalorder %v378, %v415
        %vm445 = vcmp.lt.s32.totalorder %v379, %v415
        %vm446 = vcmp.lt.s32.totalorder %v380, %v415
        %vm447 = vcmp.lt.s32.totalorder %v381, %v415
        %vm448 = vcmp.lt.s32.totalorder %v382, %v415
        %vm449 = vcmp.lt.s32.totalorder %v383, %v415
        %vm450 = vcmp.lt.s32.totalorder %v384, %v415
        %vm451 = vcmp.lt.s32.totalorder %v385, %v415
        %vm452 = vcmp.lt.s32.totalorder %v386, %v415
        %vm453 = vcmp.lt.s32.totalorder %v387, %v415
        %vm454 = vcmp.lt.s32.totalorder %v388, %v415
        %vm455 = vcmp.lt.s32.totalorder %v389, %v415
        %vm456 = vcmp.lt.s32.totalorder %v390, %v415
        %vm457 = vcmp.lt.s32.totalorder %v391, %v415
        %vm458 = vcmp.lt.s32.totalorder %v392, %v415
        %vm459 = vcmp.lt.s32.totalorder %v393, %v415
        %vm460 = vcmp.lt.s32.totalorder %v394, %v415
        %vm461 = vcmp.lt.s32.totalorder %v395, %v415
        %vm462 = vcmp.lt.s32.totalorder %v396, %v415
        %vm463 = vcmp.lt.s32.totalorder %v397, %v415
        %vm464 = vcmp.lt.s32.totalorder %v398, %v415
        %vm465 = vcmp.lt.s32.totalorder %v399, %v415
        %vm466 = vcmp.lt.s32.totalorder %v400, %v415
        %vm467 = vcmp.lt.s32.totalorder %v401, %v415
        %vm468 = vcmp.lt.s32.totalorder %v402, %v415
        %vm469 = vcmp.lt.s32.totalorder %v403, %v415
        %vm470 = vcmp.lt.s32.totalorder %v404, %v415
        %vm471 = vcmp.lt.s32.totalorder %v405, %v415
        %vm472 = vcmp.lt.s32.totalorder %v406, %v415
        %vm473 = vcmp.lt.s32.totalorder %v407, %v415
        %vm474 = vcmp.lt.s32.totalorder %v408, %v415
        %vm475 = vcmp.lt.s32.totalorder %v409, %v415
        %vm476 = vcmp.lt.s32.totalorder %v410, %v415
        %vm477 = vcmp.lt.s32.totalorder %v411, %v415
        %vm478 = vcmp.lt.s32.totalorder %v412, %v415
        %vm479 = vcmp.lt.s32.totalorder %v413, %v415
        %s480 = sadd.s32 %s414, 128
        %v481 = vstv %s480
        %vm482 = vcmp.lt.s32.totalorder %v350, %v481
        %vm483 = vcmp.lt.s32.totalorder %v351, %v481
        %vm484 = vcmp.lt.s32.totalorder %v352, %v481
        %vm485 = vcmp.lt.s32.totalorder %v353, %v481
        %vm486 = vcmp.lt.s32.totalorder %v354, %v481
        %vm487 = vcmp.lt.s32.totalorder %v355, %v481
        %vm488 = vcmp.lt.s32.totalorder %v356, %v481
        %vm489 = vcmp.lt.s32.totalorder %v357, %v481
        %vm490 = vcmp.lt.s32.totalorder %v358, %v481
        %vm491 = vcmp.lt.s32.totalorder %v359, %v481
        %vm492 = vcmp.lt.s32.totalorder %v360, %v481
        %vm493 = vcmp.lt.s32.totalorder %v361, %v481
        %vm494 = vcmp.lt.s32.totalorder %v362, %v481
        %vm495 = vcmp.lt.s32.totalorder %v363, %v481
        %vm496 = vcmp.lt.s32.totalorder %v364, %v481
        %vm497 = vcmp.lt.s32.totalorder %v365, %v481
        %vm498 = vcmp.lt.s32.totalorder %v366, %v481
        %vm499 = vcmp.lt.s32.totalorder %v367, %v481
        %vm500 = vcmp.lt.s32.totalorder %v368, %v481
        %vm501 = vcmp.lt.s32.totalorder %v369, %v481
        %vm502 = vcmp.lt.s32.totalorder %v370, %v481
        %vm503 = vcmp.lt.s32.totalorder %v371, %v481
        %vm504 = vcmp.lt.s32.totalorder %v372, %v481
        %vm505 = vcmp.lt.s32.totalorder %v373, %v481
        %vm506 = vcmp.lt.s32.totalorder %v374, %v481
        %vm507 = vcmp.lt.s32.totalorder %v375, %v481
        %vm508 = vcmp.lt.s32.totalorder %v376, %v481
        %vm509 = vcmp.lt.s32.totalorder %v377, %v481
        %vm510 = vcmp.lt.s32.totalorder %v378, %v481
        %vm511 = vcmp.lt.s32.totalorder %v379, %v481
        %vm512 = vcmp.lt.s32.totalorder %v380, %v481
        %vm513 = vcmp.lt.s32.totalorder %v381, %v481
        %vm514 = vcmp.lt.s32.totalorder %v382, %v481
        %vm515 = vcmp.lt.s32.totalorder %v383, %v481
        %vm516 = vcmp.lt.s32.totalorder %v384, %v481
        %vm517 = vcmp.lt.s32.totalorder %v385, %v481
        %vm518 = vcmp.lt.s32.totalorder %v386, %v481
        %vm519 = vcmp.lt.s32.totalorder %v387, %v481
        %vm520 = vcmp.lt.s32.totalorder %v388, %v481
        %vm521 = vcmp.lt.s32.totalorder %v389, %v481
        %vm522 = vcmp.lt.s32.totalorder %v390, %v481
        %vm523 = vcmp.lt.s32.totalorder %v391, %v481
        %vm524 = vcmp.lt.s32.totalorder %v392, %v481
        %vm525 = vcmp.lt.s32.totalorder %v393, %v481
        %vm526 = vcmp.lt.s32.totalorder %v394, %v481
        %vm527 = vcmp.lt.s32.totalorder %v395, %v481
        %vm528 = vcmp.lt.s32.totalorder %v396, %v481
        %vm529 = vcmp.lt.s32.totalorder %v397, %v481
        %vm530 = vcmp.lt.s32.totalorder %v398, %v481
        %vm531 = vcmp.lt.s32.totalorder %v399, %v481
        %vm532 = vcmp.lt.s32.totalorder %v400, %v481
        %vm533 = vcmp.lt.s32.totalorder %v401, %v481
        %vm534 = vcmp.lt.s32.totalorder %v402, %v481
        %vm535 = vcmp.lt.s32.totalorder %v403, %v481
        %vm536 = vcmp.lt.s32.totalorder %v404, %v481
        %vm537 = vcmp.lt.s32.totalorder %v405, %v481
        %vm538 = vcmp.lt.s32.totalorder %v406, %v481
        %vm539 = vcmp.lt.s32.totalorder %v407, %v481
        %vm540 = vcmp.lt.s32.totalorder %v408, %v481
        %vm541 = vcmp.lt.s32.totalorder %v409, %v481
        %vm542 = vcmp.lt.s32.totalorder %v410, %v481
        %vm543 = vcmp.lt.s32.totalorder %v411, %v481
        %vm544 = vcmp.lt.s32.totalorder %v412, %v481
        %vm545 = vcmp.lt.s32.totalorder %v413, %v481
        %v546 = vmul.f32 %v285, 1.442695
        %v547 = vpow.pop %v546
        %v548 = vmul.f32 %v286, 1.442695
        %v549 = vpow.pop %v548
        %v550 = vmul.f32 %v287, 1.442695
        %v551 = vpow.pop %v550
        %v552 = vmul.f32 %v288, 1.442695
        %v553 = vpow.pop %v552
        %v554 = vmul.f32 %v289, 1.442695
        %v555 = vpow.pop %v554
        %v556 = vmul.f32 %v290, 1.442695
        %v557 = vpow.pop %v556
        %v558 = vmul.f32 %v291, 1.442695
        %v559 = vpow.pop %v558
        %v560 = vmul.f32 %v292, 1.442695
        %v561 = vpow.pop %v560
        %v562 = vmul.f32 %v293, 1.442695
        %v563 = vpow.pop %v562
        %v564 = vmul.f32 %v294, 1.442695
        %v565 = vpow.pop %v564
        %v566 = vmul.f32 %v295, 1.442695
        %v567 = vpow.pop %v566
        %v568 = vmul.f32 %v296, 1.442695
        %v569 = vpow.pop %v568
        %v570 = vmul.f32 %v297, 1.442695
        %v571 = vpow.pop %v570
        %v572 = vmul.f32 %v298, 1.442695
        %v573 = vpow.pop %v572
        %v574 = vmul.f32 %v299, 1.442695
        %v575 = vpow.pop %v574
        %v576 = vmul.f32 %v300, 1.442695
        %v577 = vpow.pop %v576
        %v578 = vmul.f32 %v301, 1.442695
        %v579 = vpow.pop %v578
        %v580 = vmul.f32 %v302, 1.442695
        %v581 = vpow.pop %v580
        %v582 = vmul.f32 %v303, 1.442695
        %v583 = vpow.pop %v582
        %v584 = vmul.f32 %v304, 1.442695
        %v585 = vpow.pop %v584
        %v586 = vmul.f32 %v305, 1.442695
        %v587 = vpow.pop %v586
        %v588 = vmul.f32 %v306, 1.442695
        %v589 = vpow.pop %v588
        %v590 = vmul.f32 %v307, 1.442695
        %v591 = vpow.pop %v590
        %v592 = vmul.f32 %v308, 1.442695
        %v593 = vpow.pop %v592
        %v594 = vmul.f32 %v309, 1.442695
        %v595 = vpow.pop %v594
        %v596 = vmul.f32 %v310, 1.442695
        %v597 = vpow.pop %v596
        %v598 = vmul.f32 %v311, 1.442695
        %v599 = vpow.pop %v598
        %v600 = vmul.f32 %v312, 1.442695
        %v601 = vpow.pop %v600
        %v602 = vmul.f32 %v313, 1.442695
        %v603 = vpow.pop %v602
        %v604 = vmul.f32 %v314, 1.442695
        %v605 = vpow.pop %v604
        %v606 = vmul.f32 %v315, 1.442695
        %v607 = vpow.pop %v606
        %v608 = vmul.f32 %v316, 1.442695
        %v609 = vpow.pop %v608
        %v610 = vmul.f32 %v317, 1.442695
        %v611 = vpow.pop %v610
        %v612 = vmul.f32 %v318, 1.442695
        %v613 = vpow.pop %v612
        %v614 = vmul.f32 %v319, 1.442695
        %v615 = vpow.pop %v614
        %v616 = vmul.f32 %v320, 1.442695
        %v617 = vpow.pop %v616
        %v618 = vmul.f32 %v321, 1.442695
        %v619 = vpow.pop %v618
        %v620 = vmul.f32 %v322, 1.442695
        %v621 = vpow.pop %v620
        %v622 = vmul.f32 %v323, 1.442695
        %v623 = vpow.pop %v622
        %v624 = vmul.f32 %v324, 1.442695
        %v625 = vpow.pop %v624
        %v626 = vmul.f32 %v325, 1.442695
        %v627 = vpow.pop %v626
        %v628 = vmul.f32 %v326, 1.442695
        %v629 = vpow.pop %v628
        %v630 = vmul.f32 %v327, 1.442695
        %v631 = vpow.pop %v630
        %v632 = vmul.f32 %v328, 1.442695
        %v633 = vpow.pop %v632
        %v634 = vmul.f32 %v329, 1.442695
        %v635 = vpow.pop %v634
        %v636 = vmul.f32 %v330, 1.442695
        %v637 = vpow.pop %v636
        %v638 = vmul.f32 %v331, 1.442695
        %v639 = vpow.pop %v638
        %v640 = vmul.f32 %v332, 1.442695
        %v641 = vpow.pop %v640
        %v642 = vmul.f32 %v333, 1.442695
        %v643 = vpow.pop %v642
        %v644 = vmul.f32 %v334, 1.442695
        %v645 = vpow.pop %v644
        %v646 = vmul.f32 %v335, 1.442695
        %v647 = vpow.pop %v646
        %v648 = vmul.f32 %v336, 1.442695
        %v649 = vpow.pop %v648
        %v650 = vmul.f32 %v337, 1.442695
        %v651 = vpow.pop %v650
        %v652 = vmul.f32 %v338, 1.442695
        %v653 = vpow.pop %v652
        %v654 = vmul.f32 %v339, 1.442695
        %v655 = vpow.pop %v654
        %v656 = vmul.f32 %v340, 1.442695
        %v657 = vpow.pop %v656
        %v658 = vmul.f32 %v341, 1.442695
        %v659 = vpow.pop %v658
        %v660 = vmul.f32 %v342, 1.442695
        %v661 = vpow.pop %v660
        %v662 = vmul.f32 %v343, 1.442695
        %v663 = vpow.pop %v662
        %v664 = vmul.f32 %v344, 1.442695
        %v665 = vpow.pop %v664
        %v666 = vmul.f32 %v345, 1.442695
        %v667 = vpow.pop %v666
        %v668 = vmul.f32 %v346, 1.442695
        %v669 = vpow.pop %v668
        %v670 = vmul.f32 %v347, 1.442695
        %v671 = vpow.pop %v670
        %v672 = vmul.f32 %v348, 1.442695
        %v673 = vpow.pop %v672
        %v674 = vsel %vm482, %v547, 0.0
        %v675 = vsel %vm483, %v549, 0.0
        %v676 = vsel %vm484, %v551, 0.0
        %v677 = vsel %vm485, %v553, 0.0
        %v678 = vsel %vm486, %v555, 0.0
        %v679 = vsel %vm487, %v557, 0.0
        %v680 = vsel %vm488, %v559, 0.0
        %v681 = vsel %vm489, %v561, 0.0
        %v682 = vsel %vm490, %v563, 0.0
        %v683 = vsel %vm491, %v565, 0.0
        %v684 = vsel %vm492, %v567, 0.0
        %v685 = vsel %vm493, %v569, 0.0
        %v686 = vsel %vm494, %v571, 0.0
        %v687 = vsel %vm495, %v573, 0.0
        %v688 = vsel %vm496, %v575, 0.0
        %v689 = vsel %vm497, %v577, 0.0
        %v690 = vsel %vm498, %v579, 0.0
        %v691 = vsel %vm499, %v581, 0.0
        %v692 = vsel %vm500, %v583, 0.0
        %v693 = vsel %vm501, %v585, 0.0
        %v694 = vsel %vm502, %v587, 0.0
        %v695 = vsel %vm503, %v589, 0.0
        %v696 = vsel %vm504, %v591, 0.0
        %v697 = vsel %vm505, %v593, 0.0
        %v698 = vsel %vm506, %v595, 0.0
        %v699 = vsel %vm507, %v597, 0.0
        %v700 = vsel %vm508, %v599, 0.0
        %v701 = vsel %vm509, %v601, 0.0
        %v702 = vsel %vm510, %v603, 0.0
        %v703 = vsel %vm511, %v605, 0.0
        %v704 = vsel %vm512, %v607, 0.0
        %v705 = vsel %vm513, %v609, 0.0
        %v706 = vsel %vm514, %v611, 0.0
        %v707 = vsel %vm515, %v613, 0.0
        %v708 = vsel %vm516, %v615, 0.0
        %v709 = vsel %vm517, %v617, 0.0
        %v710 = vsel %vm518, %v619, 0.0
        %v711 = vsel %vm519, %v621, 0.0
        %v712 = vsel %vm520, %v623, 0.0
        %v713 = vsel %vm521, %v625, 0.0
        %v714 = vsel %vm522, %v627, 0.0
        %v715 = vsel %vm523, %v629, 0.0
        %v716 = vsel %vm524, %v631, 0.0
        %v717 = vsel %vm525, %v633, 0.0
        %v718 = vsel %vm526, %v635, 0.0
        %v719 = vsel %vm527, %v637, 0.0
        %v720 = vsel %vm528, %v639, 0.0
        %v721 = vsel %vm529, %v641, 0.0
        %v722 = vsel %vm530, %v643, 0.0
        %v723 = vsel %vm531, %v645, 0.0
        %v724 = vsel %vm532, %v647, 0.0
        %v725 = vsel %vm533, %v649, 0.0
        %v726 = vsel %vm534, %v651, 0.0
        %v727 = vsel %vm535, %v653, 0.0
        %v728 = vsel %vm536, %v655, 0.0
        %v729 = vsel %vm537, %v657, 0.0
        %v730 = vsel %vm538, %v659, 0.0
        %v731 = vsel %vm539, %v661, 0.0
        %v732 = vsel %vm540, %v663, 0.0
        %v733 = vsel %vm541, %v665, 0.0
        %v734 = vsel %vm542, %v667, 0.0
        %v735 = vsel %vm543, %v669, 0.0
        %v736 = vsel %vm544, %v671, 0.0
        %v737 = vsel %vm545, %v673, 0.0
        %v738 = vsel %vm416, %v285, %v674
        %v739 = vsel %vm417, %v286, %v675
        %v740 = vsel %vm418, %v287, %v676
        %v741 = vsel %vm419, %v288, %v677
        %v742 = vsel %vm420, %v289, %v678
        %v743 = vsel %vm421, %v290, %v679
        %v744 = vsel %vm422, %v291, %v680
        %v745 = vsel %vm423, %v292, %v681
        %v746 = vsel %vm424, %v293, %v682
        %v747 = vsel %vm425, %v294, %v683
        %v748 = vsel %vm426, %v295, %v684
        %v749 = vsel %vm427, %v296, %v685
        %v750 = vsel %vm428, %v297, %v686
        %v751 = vsel %vm429, %v298, %v687
        %v752 = vsel %vm430, %v299, %v688
        %v753 = vsel %vm431, %v300, %v689
        %v754 = vsel %vm432, %v301, %v690
        %v755 = vsel %vm433, %v302, %v691
        %v756 = vsel %vm434, %v303, %v692
        %v757 = vsel %vm435, %v304, %v693
        %v758 = vsel %vm436, %v305, %v694
        %v759 = vsel %vm437, %v306, %v695
        %v760 = vsel %vm438, %v307, %v696
        %v761 = vsel %vm439, %v308, %v697
        %v762 = vsel %vm440, %v309, %v698
        %v763 = vsel %vm441, %v310, %v699
        %v764 = vsel %vm442, %v311, %v700
        %v765 = vsel %vm443, %v312, %v701
        %v766 = vsel %vm444, %v313, %v702
        %v767 = vsel %vm445, %v314, %v703
        %v768 = vsel %vm446, %v315, %v704
        %v769 = vsel %vm447, %v316, %v705
        %v770 = vsel %vm448, %v317, %v706
        %v771 = vsel %vm449, %v318, %v707
        %v772 = vsel %vm450, %v319, %v708
        %v773 = vsel %vm451, %v320, %v709
        %v774 = vsel %vm452, %v321, %v710
        %v775 = vsel %vm453, %v322, %v711
        %v776 = vsel %vm454, %v323, %v712
        %v777 = vsel %vm455, %v324, %v713
        %v778 = vsel %vm456, %v325, %v714
        %v779 = vsel %vm457, %v326, %v715
        %v780 = vsel %vm458, %v327, %v716
        %v781 = vsel %vm459, %v328, %v717
        %v782 = vsel %vm460, %v329, %v718
        %v783 = vsel %vm461, %v330, %v719
        %v784 = vsel %vm462, %v331, %v720
        %v785 = vsel %vm463, %v332, %v721
        %v786 = vsel %vm464, %v333, %v722
        %v787 = vsel %vm465, %v334, %v723
        %v788 = vsel %vm466, %v335, %v724
        %v789 = vsel %vm467, %v336, %v725
        %v790 = vsel %vm468, %v337, %v726
        %v791 = vsel %vm469, %v338, %v727
        %v792 = vsel %vm470, %v339, %v728
        %v793 = vsel %vm471, %v340, %v729
        %v794 = vsel %vm472, %v341, %v730
        %v795 = vsel %vm473, %v342, %v731
        %v796 = vsel %vm474, %v343, %v732
        %v797 = vsel %vm475, %v344, %v733
        %v798 = vsel %vm476, %v345, %v734
        %v799 = vsel %vm477, %v346, %v735
        %v800 = vsel %vm478, %v347, %v736
        %v801 = vsel %vm479, %v348, %v737
        %v802 = vmul.f32 %v738, %v738
        %v803 = vmul.f32 %v739, %v739
        %v804 = vmul.f32 %v740, %v740
        %v805 = vmul.f32 %v741, %v741
        %v806 = vmul.f32 %v742, %v742
        %v807 = vmul.f32 %v743, %v743
        %v808 = vmul.f32 %v744, %v744
        %v809 = vmul.f32 %v745, %v745
        %v810 = vmul.f32 %v746, %v746
        %v811 = vmul.f32 %v747, %v747
        %v812 = vmul.f32 %v748, %v748
        %v813 = vmul.f32 %v749, %v749
        %v814 = vmul.f32 %v750, %v750
        %v815 = vmul.f32 %v751, %v751
        %v816 = vmul.f32 %v752, %v752
        %v817 = vmul.f32 %v753, %v753
        %v818 = vmul.f32 %v754, %v754
        %v819 = vmul.f32 %v755, %v755
        %v820 = vmul.f32 %v756, %v756
        %v821 = vmul.f32 %v757, %v757
        %v822 = vmul.f32 %v758, %v758
        %v823 = vmul.f32 %v759, %v759
        %v824 = vmul.f32 %v760, %v760
        %v825 = vmul.f32 %v761, %v761
        %v826 = vmul.f32 %v762, %v762
        %v827 = vmul.f32 %v763, %v763
        %v828 = vmul.f32 %v764, %v764
        %v829 = vmul.f32 %v765, %v765
        %v830 = vmul.f32 %v766, %v766
        %v831 = vmul.f32 %v767, %v767
        %v832 = vmul.f32 %v768, %v768
        %v833 = vmul.f32 %v769, %v769
        %v834 = vmul.f32 %v770, %v770
        %v835 = vmul.f32 %v771, %v771
        %v836 = vmul.f32 %v772, %v772
        %v837 = vmul.f32 %v773, %v773
        %v838 = vmul.f32 %v774, %v774
        %v839 = vmul.f32 %v775, %v775
        %v840 = vmul.f32 %v776, %v776
        %v841 = vmul.f32 %v777, %v777
        %v842 = vmul.f32 %v778, %v778
        %v843 = vmul.f32 %v779, %v779
        %v844 = vmul.f32 %v780, %v780
        %v845 = vmul.f32 %v781, %v781
        %v846 = vmul.f32 %v782, %v782
        %v847 = vmul.f32 %v783, %v783
        %v848 = vmul.f32 %v784, %v784
        %v849 = vmul.f32 %v785, %v785
        %v850 = vmul.f32 %v786, %v786
        %v851 = vmul.f32 %v787, %v787
        %v852 = vmul.f32 %v788, %v788
        %v853 = vmul.f32 %v789, %v789
        %v854 = vmul.f32 %v790, %v790
        %v855 = vmul.f32 %v791, %v791
        %v856 = vmul.f32 %v792, %v792
        %v857 = vmul.f32 %v793, %v793
        %v858 = vmul.f32 %v794, %v794
        %v859 = vmul.f32 %v795, %v795
        %v860 = vmul.f32 %v796, %v796
        %v861 = vmul.f32 %v797, %v797
        %v862 = vmul.f32 %v798, %v798
        %v863 = vmul.f32 %v799, %v799
        %v864 = vmul.f32 %v800, %v800
        %v865 = vmul.f32 %v801, %v801
        %v866 = vadd.f32 %v802, %v803
        %v867 = vadd.f32 %v866, %v804
        %v868 = vadd.f32 %v867, %v805
        %v869 = vadd.f32 %v868, %v806
        %v870 = vadd.f32 %v869, %v807
        %v871 = vadd.f32 %v870, %v808
        %v872 = vadd.f32 %v871, %v809
        %v873 = vadd.f32 %v872, %v810
        %v874 = vadd.f32 %v873, %v811
        %v875 = vadd.f32 %v874, %v812
        %v876 = vadd.f32 %v875, %v813
        %v877 = vadd.f32 %v876, %v814
        %v878 = vadd.f32 %v877, %v815
        %v879 = vadd.f32 %v878, %v816
        %v880 = vadd.f32 %v879, %v817
        %v881 = vadd.f32 %v880, %v818
        %v882 = vadd.f32 %v881, %v819
        %v883 = vadd.f32 %v882, %v820
        %v884 = vadd.f32 %v883, %v821
        %v885 = vadd.f32 %v884, %v822
        %v886 = vadd.f32 %v885, %v823
        %v887 = vadd.f32 %v886, %v824
        %v888 = vadd.f32 %v887, %v825
        %v889 = vadd.f32 %v888, %v826
        %v890 = vadd.f32 %v889, %v827
        %v891 = vadd.f32 %v890, %v828
        %v892 = vadd.f32 %v891, %v829
        %v893 = vadd.f32 %v892, %v830
        %v894 = vadd.f32 %v893, %v831
        %v895 = vadd.f32 %v894, %v832
        %v896 = vadd.f32 %v895, %v833
        %v897 = vadd.f32 %v896, %v834
        %v898 = vadd.f32 %v897, %v835
        %v899 = vadd.f32 %v898, %v836
        %v900 = vadd.f32 %v899, %v837
        %v901 = vadd.f32 %v900, %v838
        %v902 = vadd.f32 %v901, %v839
        %v903 = vadd.f32 %v902, %v840
        %v904 = vadd.f32 %v903, %v841
        %v905 = vadd.f32 %v904, %v842
        %v906 = vadd.f32 %v905, %v843
        %v907 = vadd.f32 %v906, %v844
        %v908 = vadd.f32 %v907, %v845
        %v909 = vadd.f32 %v908, %v846
        %v910 = vadd.f32 %v909, %v847
        %v911 = vadd.f32 %v910, %v848
        %v912 = vadd.f32 %v911, %v849
        %v913 = vadd.f32 %v912, %v850
        %v914 = vadd.f32 %v913, %v851
        %v915 = vadd.f32 %v914, %v852
        %v916 = vadd.f32 %v915, %v853
        %v917 = vadd.f32 %v916, %v854
        %v918 = vadd.f32 %v917, %v855
        %v919 = vadd.f32 %v918, %v856
        %v920 = vadd.f32 %v919, %v857
        %v921 = vadd.f32 %v920, %v858
        %v922 = vadd.f32 %v921, %v859
        %v923 = vadd.f32 %v922, %v860
        %v924 = vadd.f32 %v923, %v861
        %v925 = vadd.f32 %v924, %v862
        %v926 = vadd.f32 %v925, %v863
        %v927 = vadd.f32 %v926, %v864
        %v928 = vadd.f32 %v927, %v865
        %v929 = vrot.slane %v928, 4
        %v930 = vadd.f32 %v928, %v929
        %v931 = vrot.slane %v930, 2
        %v932 = vadd.f32 %v930, %v931
        %v933 = vrot.slane %v932, 1
        %v934 = vadd.f32 %v932, %v933
        %v935 = vld [vmem:[%s284] sm:$0x1]
        %v936 = vmul.f32 %v935, 1.442695
        %v937 = vpow.pop %v936
        %v938 = vrsqrt.pop %v934
        %v939 = vmul.f32 %v937, %v938
        %v941 = vlaneseq
        %v942 = vshrl.u32 %v941, 7
        %v943 = vsub.s32 0, %v942
        %v944 = vrot.slane %v939, %v943
        %v946 = vmul.f32 %v738, %v944
        %v947 = vmul.f32 %v739, %v944
        %v948 = vmul.f32 %v740, %v944
        %v949 = vmul.f32 %v741, %v944
        %v950 = vmul.f32 %v742, %v944
        %v951 = vmul.f32 %v743, %v944
        %v952 = vmul.f32 %v744, %v944
        %v953 = vmul.f32 %v745, %v944
        %v954 = vmul.f32 %v746, %v944
        %v955 = vmul.f32 %v747, %v944
        %v956 = vmul.f32 %v748, %v944
        %v957 = vmul.f32 %v749, %v944
        %v958 = vmul.f32 %v750, %v944
        %v959 = vmul.f32 %v751, %v944
        %v960 = vmul.f32 %v752, %v944
        %v961 = vmul.f32 %v753, %v944
        %v962 = vmul.f32 %v754, %v944
        %v963 = vmul.f32 %v755, %v944
        %v964 = vmul.f32 %v756, %v944
        %v965 = vmul.f32 %v757, %v944
        %v966 = vmul.f32 %v758, %v944
        %v967 = vmul.f32 %v759, %v944
        %v968 = vmul.f32 %v760, %v944
        %v969 = vmul.f32 %v761, %v944
        %v970 = vmul.f32 %v762, %v944
        %v971 = vmul.f32 %v763, %v944
        %v972 = vmul.f32 %v764, %v944
        %v973 = vmul.f32 %v765, %v944
        %v974 = vmul.f32 %v766, %v944
        %v975 = vmul.f32 %v767, %v944
        %v976 = vmul.f32 %v768, %v944
        %v977 = vmul.f32 %v769, %v944
        %v978 = vmul.f32 %v770, %v944
        %v979 = vmul.f32 %v771, %v944
        %v980 = vmul.f32 %v772, %v944
        %v981 = vmul.f32 %v773, %v944
        %v982 = vmul.f32 %v774, %v944
        %v983 = vmul.f32 %v775, %v944
        %v984 = vmul.f32 %v776, %v944
        %v985 = vmul.f32 %v777, %v944
        %v986 = vmul.f32 %v778, %v944
        %v987 = vmul.f32 %v779, %v944
        %v988 = vmul.f32 %v780, %v944
        %v989 = vmul.f32 %v781, %v944
        %v990 = vmul.f32 %v782, %v944
        %v991 = vmul.f32 %v783, %v944
        %v992 = vmul.f32 %v784, %v944
        %v993 = vmul.f32 %v785, %v944
        %v994 = vmul.f32 %v786, %v944
        %v995 = vmul.f32 %v787, %v944
        %v996 = vmul.f32 %v788, %v944
        %v997 = vmul.f32 %v789, %v944
        %v998 = vmul.f32 %v790, %v944
        %v999 = vmul.f32 %v791, %v944
        %v1000 = vmul.f32 %v792, %v944
        %v1001 = vmul.f32 %v793, %v944
        %v1002 = vmul.f32 %v794, %v944
        %v1003 = vmul.f32 %v795, %v944
        %v1004 = vmul.f32 %v796, %v944
        %v1005 = vmul.f32 %v797, %v944
        %v1006 = vmul.f32 %v798, %v944
        %v1007 = vmul.f32 %v799, %v944
        %v1008 = vmul.f32 %v800, %v944
        %v1009 = vmul.f32 %v801, %v944
        %1010 = vst [vmem:[%s273] sm:$0xff] %v946
        %1011 = vst [vmem:[%s273 + $0x8] sm:$0xff] %v947
        %1012 = vst [vmem:[%s273 + $0x10] sm:$0xff] %v948
        %1013 = vst [vmem:[%s273 + $0x18] sm:$0xff] %v949
        %1014 = vst [vmem:[%s273 + $0x20] sm:$0xff] %v950
        %1015 = vst [vmem:[%s273 + $0x28] sm:$0xff] %v951
        %1016 = vst [vmem:[%s273 + $0x30] sm:$0xff] %v952
        %1017 = vst [vmem:[%s273 + $0x38] sm:$0xff] %v953
        %1018 = vst [vmem:[%s273 + $0x40] sm:$0xff] %v954
        %1019 = vst [vmem:[%s273 + $0x48] sm:$0xff] %v955
        %1020 = vst [vmem:[%s273 + $0x50] sm:$0xff] %v956
        %1021 = vst [vmem:[%s273 + $0x58] sm:$0xff] %v957
        %1022 = vst [vmem:[%s273 + $0x60] sm:$0xff] %v958
        %1023 = vst [vmem:[%s273 + $0x68] sm:$0xff] %v959
        %1024 = vst [vmem:[%s273 + $0x70] sm:$0xff] %v960
        %1025 = vst [vmem:[%s273 + $0x78] sm:$0xff] %v961
        %1026 = vst [vmem:[%s273 + $0x80] sm:$0xff] %v962
        %1027 = vst [vmem:[%s273 + $0x88] sm:$0xff] %v963
        %1028 = vst [vmem:[%s273 + $0x90] sm:$0xff] %v964
        %1029 = vst [vmem:[%s273 + $0x98] sm:$0xff] %v965
        %1030 = vst [vmem:[%s273 + $0xa0] sm:$0xff] %v966
        %1031 = vst [vmem:[%s273 + $0xa8] sm:$0xff] %v967
        %1032 = vst [vmem:[%s273 + $0xb0] sm:$0xff] %v968
        %1033 = vst [vmem:[%s273 + $0xb8] sm:$0xff] %v969
        %1034 = vst [vmem:[%s273 + $0xc0] sm:$0xff] %v970
        %1035 = vst [vmem:[%s273 + $0xc8] sm:$0xff] %v971
        %1036 = vst [vmem:[%s273 + $0xd0] sm:$0xff] %v972
        %1037 = vst [vmem:[%s273 + $0xd8] sm:$0xff] %v973
        %1038 = vst [vmem:[%s273 + $0xe0] sm:$0xff] %v974
        %1039 = vst [vmem:[%s273 + $0xe8] sm:$0xff] %v975
        %1040 = vst [vmem:[%s273 + $0xf0] sm:$0xff] %v976
        %1041 = vst [vmem:[%s273 + $0xf8] sm:$0xff] %v977
        %1042 = vst [vmem:[%s273 + $0x100] sm:$0xff] %v978
        %1043 = vst [vmem:[%s273 + $0x108] sm:$0xff] %v979
        %1044 = vst [vmem:[%s273 + $0x110] sm:$0xff] %v980
        %1045 = vst [vmem:[%s273 + $0x118] sm:$0xff] %v981
        %1046 = vst [vmem:[%s273 + $0x120] sm:$0xff] %v982
        %1047 = vst [vmem:[%s273 + $0x128] sm:$0xff] %v983
        %1048 = vst [vmem:[%s273 + $0x130] sm:$0xff] %v984
        %1049 = vst [vmem:[%s273 + $0x138] sm:$0xff] %v985
        %1050 = vst [vmem:[%s273 + $0x140] sm:$0xff] %v986
        %1051 = vst [vmem:[%s273 + $0x148] sm:$0xff] %v987
        %1052 = vst [vmem:[%s273 + $0x150] sm:$0xff] %v988
        %1053 = vst [vmem:[%s273 + $0x158] sm:$0xff] %v989
        %1054 = vst [vmem:[%s273 + $0x160] sm:$0xff] %v990
        %1055 = vst [vmem:[%s273 + $0x168] sm:$0xff] %v991
        %1056 = vst [vmem:[%s273 + $0x170] sm:$0xff] %v992
        %1057 = vst [vmem:[%s273 + $0x178] sm:$0xff] %v993
        %1058 = vst [vmem:[%s273 + $0x180] sm:$0xff] %v994
        %1059 = vst [vmem:[%s273 + $0x188] sm:$0xff] %v995
        %1060 = vst [vmem:[%s273 + $0x190] sm:$0xff] %v996
        %1061 = vst [vmem:[%s273 + $0x198] sm:$0xff] %v997
        %1062 = vst [vmem:[%s273 + $0x1a0] sm:$0xff] %v998
        %1063 = vst [vmem:[%s273 + $0x1a8] sm:$0xff] %v999
        %1064 = vst [vmem:[%s273 + $0x1b0] sm:$0xff] %v1000
        %1065 = vst [vmem:[%s273 + $0x1b8] sm:$0xff] %v1001
        %1066 = vst [vmem:[%s273 + $0x1c0] sm:$0xff] %v1002
        %1067 = vst [vmem:[%s273 + $0x1c8] sm:$0xff] %v1003
        %1068 = vst [vmem:[%s273 + $0x1d0] sm:$0xff] %v1004
        %1069 = vst [vmem:[%s273 + $0x1d8] sm:$0xff] %v1005
        %1070 = vst [vmem:[%s273 + $0x1e0] sm:$0xff] %v1006
        %1071 = vst [vmem:[%s273 + $0x1e8] sm:$0xff] %v1007
        %1072 = vst [vmem:[%s273 + $0x1f0] sm:$0xff] %v1008
        %1073 = vst [vmem:[%s273 + $0x1f8] sm:$0xff] %v1009
        %v1074 = vld [vmem:[%s284] sm:$0x1]
        %v1075 = vld [vmem:[%s243] sm:$0xff]
        %v1076 = vld [vmem:[%s243 + $0x8] sm:$0xff]
        %v1077 = vld [vmem:[%s243 + $0x10] sm:$0xff]
        %v1078 = vld [vmem:[%s243 + $0x18] sm:$0xff]
        %v1079 = vld [vmem:[%s243 + $0x20] sm:$0xff]
        %v1080 = vld [vmem:[%s243 + $0x28] sm:$0xff]
        %v1081 = vld [vmem:[%s243 + $0x30] sm:$0xff]
        %v1082 = vld [vmem:[%s243 + $0x38] sm:$0xff]
        %v1083 = vld [vmem:[%s243 + $0x40] sm:$0xff]
        %v1084 = vld [vmem:[%s243 + $0x48] sm:$0xff]
        %v1085 = vld [vmem:[%s243 + $0x50] sm:$0xff]
        %v1086 = vld [vmem:[%s243 + $0x58] sm:$0xff]
        %v1087 = vld [vmem:[%s243 + $0x60] sm:$0xff]
        %v1088 = vld [vmem:[%s243 + $0x68] sm:$0xff]
        %v1089 = vld [vmem:[%s243 + $0x70] sm:$0xff]
        %v1090 = vld [vmem:[%s243 + $0x78] sm:$0xff]
        %v1092 = vlaneseq
        %v1093 = vshrl.u32 %v1092, 7
        %v1094 = vsub.s32 0, %v1093
        %v1095 = vrot.slane %v1074, %v1094
        %v1097 = vadd.f32 %v1095, %v1075
        %v1098 = vadd.f32 %v1095, %v1076
        %v1099 = vadd.f32 %v1095, %v1077
        %v1100 = vadd.f32 %v1095, %v1078
        %v1101 = vadd.f32 %v1095, %v1079
        %v1102 = vadd.f32 %v1095, %v1080
        %v1103 = vadd.f32 %v1095, %v1081
        %v1104 = vadd.f32 %v1095, %v1082
        %v1105 = vadd.f32 %v1095, %v1083
        %v1106 = vadd.f32 %v1095, %v1084
        %v1107 = vadd.f32 %v1095, %v1085
        %v1108 = vadd.f32 %v1095, %v1086
        %v1109 = vadd.f32 %v1095, %v1087
        %v1110 = vadd.f32 %v1095, %v1088
        %v1111 = vadd.f32 %v1095, %v1089
        %v1112 = vadd.f32 %v1095, %v1090
        %v1113 = vlog2.pop %v934
        %v1114 = vmul.f32 %v1113, 0.6931472
        %v1115 = vmul.f32 %v1114, 0.5
        %v1116 = vsub.f32 %v1097, %v1115
        %v1117 = vsub.f32 %v1098, %v1115
        %v1118 = vsub.f32 %v1099, %v1115
        %v1119 = vsub.f32 %v1100, %v1115
        %v1120 = vsub.f32 %v1101, %v1115
        %v1121 = vsub.f32 %v1102, %v1115
        %v1122 = vsub.f32 %v1103, %v1115
        %v1123 = vsub.f32 %v1104, %v1115
        %v1124 = vsub.f32 %v1105, %v1115
        %v1125 = vsub.f32 %v1106, %v1115
        %v1126 = vsub.f32 %v1107, %v1115
        %v1127 = vsub.f32 %v1108, %v1115
        %v1128 = vsub.f32 %v1109, %v1115
        %v1129 = vsub.f32 %v1110, %v1115
        %v1130 = vsub.f32 %v1111, %v1115
        %v1131 = vsub.f32 %v1112, %v1115
        %1132 = vst [vmem:[%s280] sm:$0xff] %v1116
        %1133 = vst [vmem:[%s280 + $0x8] sm:$0xff] %v1117
        %1134 = vst [vmem:[%s280 + $0x10] sm:$0xff] %v1118
        %1135 = vst [vmem:[%s280 + $0x18] sm:$0xff] %v1119
        %1136 = vst [vmem:[%s280 + $0x20] sm:$0xff] %v1120
        %1137 = vst [vmem:[%s280 + $0x28] sm:$0xff] %v1121
        %1138 = vst [vmem:[%s280 + $0x30] sm:$0xff] %v1122
        %1139 = vst [vmem:[%s280 + $0x38] sm:$0xff] %v1123
        %1140 = vst [vmem:[%s280 + $0x40] sm:$0xff] %v1124
        %1141 = vst [vmem:[%s280 + $0x48] sm:$0xff] %v1125
        %1142 = vst [vmem:[%s280 + $0x50] sm:$0xff] %v1126
        %1143 = vst [vmem:[%s280 + $0x58] sm:$0xff] %v1127
        %1144 = vst [vmem:[%s280 + $0x60] sm:$0xff] %v1128
        %1145 = vst [vmem:[%s280 + $0x68] sm:$0xff] %v1129
        %1146 = vst [vmem:[%s280 + $0x70] sm:$0xff] %v1130
        %1147 = vst [vmem:[%s280 + $0x78] sm:$0xff] %v1131
        %s1148 = sand.u32 %s116, 1
        %s1149 = scalar_lea.sflag [#allocation4], %s1148
        %s1150 = sand.u32 %s116, 1
        %s1151 = smul.addr %s1150, 512
        %s1152 = scalar_lea.vmem [#allocation7], %s1151
        %s1153 = sand.u32 %s142, 1
        %s1154 = scalar_lea.sflag [#allocation9], %s1153
        %s1155 = sand.u32 %s142, 1
        %s1156 = smul.addr %s1155, 128
        %s1157 = scalar_lea.vmem [#allocation8], %s1156
        // Predicated region
        $region41: #{tpu_custom_call.1} parent=31 // pred_check
          %p1158 = pneg %p126
        $region42: #{tpu_custom_call.1} parent=31 // pred_check_branch
          %1160 = sbr.rel (%p1158) target = $region44
        $region43: #{tpu_custom_call.1} parent=31 // pred_region
          %s1162 = ssub.s32 8192, 8192
          %1163 = vsyncadd %s1149, %s1162
          %s1164 = smul.addr %s28, 128
          %s1165 = scalar_lea.hbm %s3, %s1164
          %s1166 = sshll.u32 %s1152, 4
          %s1167 = int_to_ptr.vmem [resolvable:$true] %s1166
          %1172 = dma.vmem_to_hbm [thread:$0]  %s1167, 8192, %s1165, %s1149, 128, 512, 8
        $region44: #{tpu_custom_call.1} parent=31 // pred_fallthru
          _
        // Predicated region
        $region45: #{tpu_custom_call.1} parent=31 // pred_check
          %p1173 = pneg %p152
        $region46: #{tpu_custom_call.1} parent=31 // pred_check_branch
          %1175 = sbr.rel (%p1173) target = $region48
        $region47: #{tpu_custom_call.1} parent=31 // pred_region
          %s1177 = ssub.s32 2048, 2048
          %1178 = vsyncadd %s1154, %s1177
          %s1179 = smul.addr %s28, 16
          %s1180 = smul.addr %s1179, 128
          %s1181 = scalar_lea.hbm %s4, %s1180
          %s1182 = sshll.u32 %s1157, 4
          %s1183 = int_to_ptr.vmem [resolvable:$true] %s1182
          %1188 = dma.vmem_to_hbm [thread:$0]  %s1183, 2048, %s1181, %s1154, 128, 128, 8
        $region48: #{tpu_custom_call.1} parent=31 // pred_fallthru
          _
      $region32: #{tpu_custom_call.1} parent=5 // pred_fallthru
        _
      %p1189 = scmp.le.s32.totalorder 2, %s23
      // Predicated region
      $region49: #{tpu_custom_call.1} parent=5 // pred_check
        %p1190 = pneg %p1189
      $region50: #{tpu_custom_call.1} parent=5 // pred_check_branch
        %1192 = sbr.rel (%p1190) target = $region52
      $region51: #{tpu_custom_call.1} parent=5 // pred_region
        %s1193 = ssub.s32 %s23, 2
        // Predicated region
        $region53: #{tpu_custom_call.1} parent=51 // pred_check
          %p1194 = pneg %p132
        $region54: #{tpu_custom_call.1} parent=51 // pred_check_branch
          %1196 = sbr.rel (%p1194) target = $region56
        $region55: #{tpu_custom_call.1} parent=51 // pred_region
          %s1197 = sand.u32 %s117, 1
          %s1198 = scalar_lea.sflag [#allocation4], %s1197
          %s1199 = sand.u32 %s117, 1
          %s1200 = smul.addr %s1199, 512
          %s1201 = scalar_lea.vmem [#allocation7], %s1200
          %1202 = dma.done %s1198, 8192
        $region56: #{tpu_custom_call.1} parent=51 // pred_fallthru
          _
        // Predicated region
        $region57: #{tpu_custom_call.1} parent=51 // pred_check
          %p1203 = pneg %p158
        $region58: #{tpu_custom_call.1} parent=51 // pred_check_branch
          %1205 = sbr.rel (%p1203) target = $region60
        $region59: #{tpu_custom_call.1} parent=51 // pred_region
          %s1206 = sand.u32 %s143, 1
          %s1207 = scalar_lea.sflag [#allocation9], %s1206
          %s1208 = sand.u32 %s143, 1
          %s1209 = smul.addr %s1208, 128
          %s1210 = scalar_lea.vmem [#allocation8], %s1209
          %1211 = dma.done %s1207, 2048
        $region60: #{tpu_custom_call.1} parent=51 // pred_fallthru
          _
      $region52: #{tpu_custom_call.1} parent=5 // pred_fallthru
        _
    $region6: #{tpu_custom_call.1} parent=1 // loop_footer
      %s27 = sadd.s32 1, %s23
    $region7: #{tpu_custom_call.1} parent=1 // loop_footer_branch
      %22 = sbr.rel target = $region3
    $region8: #{tpu_custom_call.1} parent=1 // loop_exit
      _
    %1212 = vsyncpa [#allocation3], 1
    %s1213 = scalar_lea.sflag [#allocation3], 1
    %1214 = vsyncpa %s1213, 1
    %1215 = vsyncpa [#allocation6], 1
    %s1216 = scalar_lea.sflag [#allocation6], 1
    %1217 = vsyncpa %s1216, 1
    %1218 = vsyncpa [#allocation4], 1
    %s1219 = scalar_lea.sflag [#allocation4], 1
    %1220 = vsyncpa %s1219, 1
    %1221 = vsyncpa [#allocation9], 1
    %s1222 = scalar_lea.sflag [#allocation9], 1
    %1223 = vsyncpa %s1222, 1

</llo_original>
